<compile_context>
chip_gen: v5e
topology: v5e:2x2
jax: 0.10.0
libtpu: 0.0.40
codegen_flags: <defaults>
</compile_context>

<pallas_src>
import jax
import jax.numpy as jnp
from jax.experimental import pallas as pl
from jax.experimental.pallas import tpu as pltpu


# --------------------------- Fused network kernel --------------------------- #
def _make_fused_kernel(S, Bp, L, H, mxu_dtype=jnp.float32):
    """Wavefront-fused L-layer RNN + FC head.  S, Bp, L, H are static."""

    def kernel(x_ref, w_in_ref, b_wide_ref, w_rec_ref, w_fc_ref, b_fc_ref,
               o_ref, xw_ref):
        LH = L * H

        # ---- Hoisted, time-parallel work (off the serial critical path) ----
        #   xw[:, 0:H]         = x[t] @ W_ih0 + b0     (time varying, layer 0)
        #   xw[:, l*H:(l+1)*H] = b_l                   (constant, layers l>=1)
        xw_ref[...] = (
            jnp.dot(x_ref[...], w_in_ref[...],
                    preferred_element_type=jnp.float32)
            + b_wide_ref[...]
        )
        w_rec = w_rec_ref[...].astype(mxu_dtype)       # (L*H, L*H) block-packed

        lane = jax.lax.broadcasted_iota(jnp.int32, (Bp, LH), 1)

        # ---- Wavefront recurrence: S + L - 1 serial stages ------------------
        # Entering stage s, state block l holds h_l[s - l - 1] (zeros at start).
        # Stage 0 is peeled: every hidden is zero, the recurrent matmul
        # vanishes and only layer 0 is valid -> h0[0] = tanh(x[0]@W_ih0 + b0).
        state = jnp.where(lane < H, jnp.tanh(xw_ref[pl.ds(0, Bp), :]), 0.0)

        for s in range(1, S + L - 1):
            fused = jnp.dot(state.astype(mxu_dtype), w_rec,
                            preferred_element_type=jnp.float32)
            row = min(s, S - 1)                        # static python int
            pre = fused + xw_ref[pl.ds(row * Bp, Bp), :]
            new = jnp.tanh(pre)
            lo = max(0, s - S + 1)                     # valid layer range
            hi = min(L - 1, s)
            if lo == 0 and hi == L - 1:                # steady state: all valid
                state = new
            else:                                      # warm-up / drain stages
                mask = (lane >= lo * H) & (lane < (hi + 1) * H)
                state = jnp.where(mask, new, state)

        # ---- FC head: W_fc pre-packed to (L*H, O) -> no lane slicing --------
        o_ref[...] = (
            jnp.dot(state, w_fc_ref[...], preferred_element_type=jnp.float32)
            + b_fc_ref[...]
        ).astype(o_ref.dtype)

    return kernel


# --------------------------------- Wrapper ----------------------------------- #
def rnn_net_forward(x, params, num_layers):
    """x: (S, B, F) time-major (batch_first=False).  Returns (B, O).

    Weights must be pre-transposed: w_ih_l (F_in, H), w_hh_l (H, H),
    w_fc (H, O); biases (1, H) / (1, O).
    """
    S, B, F = x.shape
    L = num_layers
    H = params["w_hh_0"].shape[0]
    O = params["w_fc"].shape[1]

    for layer in range(L):
        f_in = F if layer == 0 else H
        assert params[f"w_ih_{layer}"].shape == (f_in, H), "w_ih must be (F_in, H)"
        assert params[f"w_hh_{layer}"].shape == (H, H), "w_hh must be (H, H)"
        assert params[f"b_{layer}"].shape == (1, H), "b must be (1, H)"
    assert params["w_fc"].shape == (H, O), "w_fc must be (H, O)"
    assert params["b_fc"].shape == (1, O), "b_fc must be (1, O)"

    # -------- Host-side prepacking (cheap XLA ops, done once) --------
    # Wide input projection: only layer 0 reads x; other columns are zero.
    w_in_wide = jnp.zeros((F, L * H), jnp.float32).at[:, :H].set(
        params["w_ih_0"])
    # Per-layer biases concatenated along lanes.
    b_wide = jnp.concatenate([params[f"b_{l}"] for l in range(L)], axis=1)
    # Block recurrence matrix: diag blocks W_hh_l, super-diag blocks W_ih_l.
    w_rec = jnp.zeros((L * H, L * H), jnp.float32)
    for l in range(L):
        w_rec = w_rec.at[l * H:(l + 1) * H, l * H:(l + 1) * H].set(
            params[f"w_hh_{l}"])
        if l >= 1:
            w_rec = w_rec.at[(l - 1) * H:l * H, l * H:(l + 1) * H].set(
                params[f"w_ih_{l}"])
    # FC head reads only the last layer's block.
    w_fc_wide = jnp.zeros((L * H, O), jnp.float32).at[(L - 1) * H:, :].set(
        params["w_fc"])
    b_fc = params["b_fc"]

    # -------- Pad batch to a sublane multiple (8) --------
    Bp = ((B + 7) // 8) * 8
    x_p = jnp.pad(x, ((0, 0), (0, Bp - B), (0, 0))) if Bp != B else x
    # Free XLA-side reshape: time-major contiguous (S, Bp, F) -> (S*Bp, F).
    x2d = x_p.reshape(S * Bp, F)

    out_p = pl.pallas_call(
        _make_fused_kernel(S, Bp, L, H),
        out_shape=jax.ShapeDtypeStruct((Bp, O), x.dtype),
        grid_spec=pltpu.PrefetchScalarGridSpec(
            num_scalar_prefetch=0,
            grid=(1,),
            in_specs=[
                pl.BlockSpec((S * Bp, F), lambda i: (0, 0)),
                pl.BlockSpec((F, L * H), lambda i: (0, 0)),
                pl.BlockSpec((1, L * H), lambda i: (0, 0)),
                pl.BlockSpec((L * H, L * H), lambda i: (0, 0)),
                pl.BlockSpec((L * H, O), lambda i: (0, 0)),
                pl.BlockSpec((1, O), lambda i: (0, 0)),
            ],
            out_specs=pl.BlockSpec((Bp, O), lambda i: (0, 0)),
            scratch_shapes=[
                pltpu.VMEM((S * Bp, L * H), jnp.float32),  # hoisted projection
            ],
        ),
        compiler_params=pltpu.CompilerParams(
            dimension_semantics=("arbitrary",)),
    )(x2d, w_in_wide, b_wide, w_rec, w_fc_wide, b_fc)

    return out_p[:B]


# --------------------------- Pure-JAX reference ------------------------------ #
def rnn_net_reference(x, params, num_layers):
    h_seq = x
    for layer in range(num_layers):
        w_ih = params[f"w_ih_{layer}"]     # (F, H)
        w_hh = params[f"w_hh_{layer}"]     # (H, H)
        b = params[f"b_{layer}"]           # (1, H)
        B = x.shape[1]
        H = w_hh.shape[1]
        h_t = jnp.zeros((B, H), jnp.float32)
        outs = []
        for t in range(h_seq.shape[0]):
            h_t = jnp.tanh(h_seq[t] @ w_ih + h_t @ w_hh + b)
            outs.append(h_t)
        h_seq = jnp.stack(outs, axis=0)
    return h_seq[-1] @ params["w_fc"] + params["b_fc"]


# ----------------------------------- Main ------------------------------------ #
if __name__ == "__main__":
    # Hyperparameters (the "params" dataclass of RNNNet)
    input_size = 32
    hidden_size = 32
    output_size = 8
    num_layers = 2
    seq_len = 8
    batch = 4

    key = jax.random.PRNGKey(0)
    keys = jax.random.split(key, 4 * num_layers + 3)

    # PyTorch-style init: U(-k, k), k = 1/sqrt(hidden_size)
    k = 1.0 / (hidden_size ** 0.5)
    params = {}
    ki = 0
    for layer in range(num_layers):
        f_in = input_size if layer == 0 else hidden_size
        # Stored pre-transposed: (F, H) so the kernel computes x @ W_ih^T directly.
        params[f"w_ih_{layer}"] = jax.random.uniform(
            keys[ki], (f_in, hidden_size), jnp.float32, -k, k); ki += 1
        params[f"w_hh_{layer}"] = jax.random.uniform(
            keys[ki], (hidden_size, hidden_size), jnp.float32, -k, k); ki += 1
        b_ih = jax.random.uniform(keys[ki], (hidden_size,), jnp.float32, -k, k); ki += 1
        b_hh = jax.random.uniform(keys[ki], (hidden_size,), jnp.float32, -k, k); ki += 1
        params[f"b_{layer}"] = (b_ih + b_hh).reshape(1, hidden_size)

    k_fc = 1.0 / (hidden_size ** 0.5)
    params["w_fc"] = jax.random.uniform(
        keys[ki], (hidden_size, output_size), jnp.float32, -k_fc, k_fc); ki += 1
    params["b_fc"] = jax.random.uniform(
        keys[ki], (output_size,), jnp.float32, -k_fc, k_fc).reshape(1, output_size); ki += 1

    # Input: (seq_len, batch, input_size) — batch_first=False convention.
    x = jax.random.normal(keys[ki], (seq_len, batch, input_size), jnp.float32)

    out = rnn_net_forward(x, params, num_layers)
    out = jax.block_until_ready(out)
    assert out.shape == (batch, output_size), out.shape

    ref = rnn_net_reference(x, params, num_layers)
    assert jnp.allclose(out, ref, atol=2e-3, rtol=2e-3), (
        "mismatch vs reference: max abs err "
        f"{float(jnp.max(jnp.abs(out - ref)))}")

    print("KERNEL_OK")
</pallas_src>

<mosaic_0001>
module attributes {stable_mosaic.version = 11 : i64} {
  func.func @kernel(%arg0: i32, %arg1: memref<64x32xf32, #tpu.memory_space<vmem>>, %arg2: memref<32x64xf32, #tpu.memory_space<vmem>>, %arg3: memref<1x64xf32, #tpu.memory_space<vmem>>, %arg4: memref<64x64xf32, #tpu.memory_space<vmem>>, %arg5: memref<64x8xf32, #tpu.memory_space<vmem>>, %arg6: memref<1x8xf32, #tpu.memory_space<vmem>>, %arg7: memref<8x8xf32, #tpu.memory_space<vmem>>, %arg8: memref<64x64xf32, #tpu.memory_space<vmem>>) attributes {dimension_semantics = [#tpu.dimension_semantics<arbitrary>], iteration_bounds = array<i64: 1>, scalar_prefetch = 0 : i64, scratch_operands = 1 : i64, tpu.core_type = #tpu.core_type<tc>, window_params = [{pipeline_mode = #tpu.pipeline_mode<synchronous>, transform_indices = @transform_0, window_bounds = array<i64: 64, 32>}, {pipeline_mode = #tpu.pipeline_mode<synchronous>, transform_indices = @transform_1, window_bounds = array<i64: 32, 64>}, {pipeline_mode = #tpu.pipeline_mode<synchronous>, transform_indices = @transform_2, window_bounds = array<i64: 1, 64>}, {pipeline_mode = #tpu.pipeline_mode<synchronous>, transform_indices = @transform_3, window_bounds = array<i64: 64, 64>}, {pipeline_mode = #tpu.pipeline_mode<synchronous>, transform_indices = @transform_4, window_bounds = array<i64: 64, 8>}, {pipeline_mode = #tpu.pipeline_mode<synchronous>, transform_indices = @transform_5, window_bounds = array<i64: 1, 8>}, {pipeline_mode = #tpu.pipeline_mode<synchronous>, transform_indices = @transform_6, window_bounds = array<i64: 8, 8>}]} {
    %c0 = arith.constant 0 : index
    %c0_0 = arith.constant 0 : index
    %0 = vector.load %arg1[%c0, %c0_0] : memref<64x32xf32, #tpu.memory_space<vmem>>, vector<64x32xf32>
    %c0_1 = arith.constant 0 : index
    %c0_2 = arith.constant 0 : index
    %1 = vector.load %arg2[%c0_1, %c0_2] : memref<32x64xf32, #tpu.memory_space<vmem>>, vector<32x64xf32>
    %cst = arith.constant dense<0.000000e+00> : vector<64x64xf32>
    %2 = tpu.matmul %0, %1, %cst {dimension_numbers = #tpu.dot_dimension_numbers<[1], [0], [0], [1], [0, 0, 1, 1], [], []>} : vector<64x32xf32>, vector<32x64xf32>, vector<64x64xf32> -> vector<64x64xf32>
    %c0_3 = arith.constant 0 : index
    %c0_4 = arith.constant 0 : index
    %3 = vector.load %arg3[%c0_3, %c0_4] : memref<1x64xf32, #tpu.memory_space<vmem>>, vector<1x64xf32>
    %4 = vector.broadcast %3 : vector<1x64xf32> to vector<64x64xf32>
    %5 = arith.addf %2, %4 : vector<64x64xf32>
    %c0_5 = arith.constant 0 : index
    %c0_6 = arith.constant 0 : index
    %6 = vector.load %arg8[%c0_5, %c0_6] : memref<64x64xf32, #tpu.memory_space<vmem>>, vector<64x64xf32>
    tpu.vector_store %arg8[%c0_5, %c0_6], %5 {strides = array<i32>} : memref<64x64xf32, #tpu.memory_space<vmem>>, vector<64x64xf32>,
    %c0_7 = arith.constant 0 : index
    %c0_8 = arith.constant 0 : index
    %7 = vector.load %arg4[%c0_7, %c0_8] : memref<64x64xf32, #tpu.memory_space<vmem>>, vector<64x64xf32>
    %8 = tpu.iota {dimensions = array<i32: 1>} : vector<8x64xi32>
    %c32_i32 = arith.constant 32 : i32
    %9 = vector.broadcast %c32_i32 : i32 to vector<8x64xi32>
    %10 = arith.cmpi slt, %8, %9 : vector<8x64xi32>
    %c0_9 = arith.constant 0 : index
    %c0_10 = arith.constant 0 : index
    %11 = vector.load %arg8[%c0_9, %c0_10] : memref<64x64xf32, #tpu.memory_space<vmem>>, vector<8x64xf32>
    %12 = math.tanh %11 : vector<8x64xf32>
    %cst_11 = arith.constant 0.000000e+00 : f32
    %13 = vector.broadcast %cst_11 : f32 to vector<8x64xf32>
    %14 = arith.select %10, %12, %13 : vector<8x64xi1>, vector<8x64xf32>
    %cst_12 = arith.constant dense<0.000000e+00> : vector<8x64xf32>
    %15 = tpu.matmul %14, %7, %cst_12 {dimension_numbers = #tpu.dot_dimension_numbers<[1], [0], [0], [1], [0, 0, 1, 1], [], []>} : vector<8x64xf32>, vector<64x64xf32>, vector<8x64xf32> -> vector<8x64xf32>
    %c8 = arith.constant 8 : index
    %c0_13 = arith.constant 0 : index
    %16 = vector.load %arg8[%c8, %c0_13] : memref<64x64xf32, #tpu.memory_space<vmem>>, vector<8x64xf32>
    %17 = arith.addf %15, %16 : vector<8x64xf32>
    %18 = math.tanh %17 : vector<8x64xf32>
    %cst_14 = arith.constant dense<0.000000e+00> : vector<8x64xf32>
    %19 = tpu.matmul %18, %7, %cst_14 {dimension_numbers = #tpu.dot_dimension_numbers<[1], [0], [0], [1], [0, 0, 1, 1], [], []>} : vector<8x64xf32>, vector<64x64xf32>, vector<8x64xf32> -> vector<8x64xf32>
    %c16 = arith.constant 16 : index
    %c0_15 = arith.constant 0 : index
    %20 = vector.load %arg8[%c16, %c0_15] : memref<64x64xf32, #tpu.memory_space<vmem>>, vector<8x64xf32>
    %21 = arith.addf %19, %20 : vector<8x64xf32>
    %22 = math.tanh %21 : vector<8x64xf32>
    %cst_16 = arith.constant dense<0.000000e+00> : vector<8x64xf32>
    %23 = tpu.matmul %22, %7, %cst_16 {dimension_numbers = #tpu.dot_dimension_numbers<[1], [0], [0], [1], [0, 0, 1, 1], [], []>} : vector<8x64xf32>, vector<64x64xf32>, vector<8x64xf32> -> vector<8x64xf32>
    %c24 = arith.constant 24 : index
    %c0_17 = arith.constant 0 : index
    %24 = vector.load %arg8[%c24, %c0_17] : memref<64x64xf32, #tpu.memory_space<vmem>>, vector<8x64xf32>
    %25 = arith.addf %23, %24 : vector<8x64xf32>
    %26 = math.tanh %25 : vector<8x64xf32>
    %cst_18 = arith.constant dense<0.000000e+00> : vector<8x64xf32>
    %27 = tpu.matmul %26, %7, %cst_18 {dimension_numbers = #tpu.dot_dimension_numbers<[1], [0], [0], [1], [0, 0, 1, 1], [], []>} : vector<8x64xf32>, vector<64x64xf32>, vector<8x64xf32> -> vector<8x64xf32>
    %c32 = arith.constant 32 : index
    %c0_19 = arith.constant 0 : index
    %28 = vector.load %arg8[%c32, %c0_19] : memref<64x64xf32, #tpu.memory_space<vmem>>, vector<8x64xf32>
    %29 = arith.addf %27, %28 : vector<8x64xf32>
    %30 = math.tanh %29 : vector<8x64xf32>
    %cst_20 = arith.constant dense<0.000000e+00> : vector<8x64xf32>
    %31 = tpu.matmul %30, %7, %cst_20 {dimension_numbers = #tpu.dot_dimension_numbers<[1], [0], [0], [1], [0, 0, 1, 1], [], []>} : vector<8x64xf32>, vector<64x64xf32>, vector<8x64xf32> -> vector<8x64xf32>
    %c40 = arith.constant 40 : index
    %c0_21 = arith.constant 0 : index
    %32 = vector.load %arg8[%c40, %c0_21] : memref<64x64xf32, #tpu.memory_space<vmem>>, vector<8x64xf32>
    %33 = arith.addf %31, %32 : vector<8x64xf32>
    %34 = math.tanh %33 : vector<8x64xf32>
    %cst_22 = arith.constant dense<0.000000e+00> : vector<8x64xf32>
    %35 = tpu.matmul %34, %7, %cst_22 {dimension_numbers = #tpu.dot_dimension_numbers<[1], [0], [0], [1], [0, 0, 1, 1], [], []>} : vector<8x64xf32>, vector<64x64xf32>, vector<8x64xf32> -> vector<8x64xf32>
    %c48 = arith.constant 48 : index
    %c0_23 = arith.constant 0 : index
    %36 = vector.load %arg8[%c48, %c0_23] : memref<64x64xf32, #tpu.memory_space<vmem>>, vector<8x64xf32>
    %37 = arith.addf %35, %36 : vector<8x64xf32>
    %38 = math.tanh %37 : vector<8x64xf32>
    %cst_24 = arith.constant dense<0.000000e+00> : vector<8x64xf32>
    %39 = tpu.matmul %38, %7, %cst_24 {dimension_numbers = #tpu.dot_dimension_numbers<[1], [0], [0], [1], [0, 0, 1, 1], [], []>} : vector<8x64xf32>, vector<64x64xf32>, vector<8x64xf32> -> vector<8x64xf32>
    %c56 = arith.constant 56 : index
    %c0_25 = arith.constant 0 : index
    %40 = vector.load %arg8[%c56, %c0_25] : memref<64x64xf32, #tpu.memory_space<vmem>>, vector<8x64xf32>
    %41 = arith.addf %39, %40 : vector<8x64xf32>
    %42 = math.tanh %41 : vector<8x64xf32>
    %cst_26 = arith.constant dense<0.000000e+00> : vector<8x64xf32>
    %43 = tpu.matmul %42, %7, %cst_26 {dimension_numbers = #tpu.dot_dimension_numbers<[1], [0], [0], [1], [0, 0, 1, 1], [], []>} : vector<8x64xf32>, vector<64x64xf32>, vector<8x64xf32> -> vector<8x64xf32>
    %c56_27 = arith.constant 56 : index
    %c0_28 = arith.constant 0 : index
    %44 = vector.load %arg8[%c56_27, %c0_28] : memref<64x64xf32, #tpu.memory_space<vmem>>, vector<8x64xf32>
    %45 = arith.addf %43, %44 : vector<8x64xf32>
    %46 = math.tanh %45 : vector<8x64xf32>
    %c32_i32_29 = arith.constant 32 : i32
    %47 = vector.broadcast %c32_i32_29 : i32 to vector<8x64xi32>
    %48 = arith.cmpi sge, %8, %47 : vector<8x64xi32>
    %c64_i32 = arith.constant 64 : i32
    %49 = vector.broadcast %c64_i32 : i32 to vector<8x64xi32>
    %50 = arith.cmpi slt, %8, %49 : vector<8x64xi32>
    %51 = arith.andi %48, %50 : vector<8x64xi1>
    %52 = arith.select %51, %46, %42 : vector<8x64xi1>, vector<8x64xf32>
    %c0_30 = arith.constant 0 : index
    %c0_31 = arith.constant 0 : index
    %53 = vector.load %arg5[%c0_30, %c0_31] : memref<64x8xf32, #tpu.memory_space<vmem>>, vector<64x8xf32>
    %cst_32 = arith.constant dense<0.000000e+00> : vector<8x8xf32>
    %54 = tpu.matmul %52, %53, %cst_32 {dimension_numbers = #tpu.dot_dimension_numbers<[1], [0], [0], [1], [0, 0, 1, 1], [], []>} : vector<8x64xf32>, vector<64x8xf32>, vector<8x8xf32> -> vector<8x8xf32>
    %c0_33 = arith.constant 0 : index
    %c0_34 = arith.constant 0 : index
    %55 = vector.load %arg6[%c0_33, %c0_34] : memref<1x8xf32, #tpu.memory_space<vmem>>, vector<1x8xf32>
    %56 = vector.broadcast %55 : vector<1x8xf32> to vector<8x8xf32>
    %57 = arith.addf %54, %56 : vector<8x8xf32>
    %c0_35 = arith.constant 0 : index
    %c0_36 = arith.constant 0 : index
    %58 = vector.load %arg7[%c0_35, %c0_36] : memref<8x8xf32, #tpu.memory_space<vmem>>, vector<8x8xf32>
    tpu.vector_store %arg7[%c0_35, %c0_36], %57 {strides = array<i32>} : memref<8x8xf32, #tpu.memory_space<vmem>>, vector<8x8xf32>,
    return
  }
  func.func @transform_0(%arg0: i32) -> (i32, i32) {
    %c0_i32 = arith.constant 0 : i32
    %c0_i32_0 = arith.constant 0 : i32
    %c0_i32_1 = arith.constant 0 : i32
    return %c0_i32, %c0_i32_0 : i32, i32
  }
  func.func @transform_1(%arg0: i32) -> (i32, i32) {
    %c0_i32 = arith.constant 0 : i32
    %c0_i32_0 = arith.constant 0 : i32
    %c0_i32_1 = arith.constant 0 : i32
    return %c0_i32, %c0_i32_0 : i32, i32
  }
  func.func @transform_2(%arg0: i32) -> (i32, i32) {
    %c0_i32 = arith.constant 0 : i32
    %c0_i32_0 = arith.constant 0 : i32
    %c0_i32_1 = arith.constant 0 : i32
    return %c0_i32, %c0_i32_0 : i32, i32
  }
  func.func @transform_3(%arg0: i32) -> (i32, i32) {
    %c0_i32 = arith.constant 0 : i32
    %c0_i32_0 = arith.constant 0 : i32
    %c0_i32_1 = arith.constant 0 : i32
    return %c0_i32, %c0_i32_0 : i32, i32
  }
  func.func @transform_4(%arg0: i32) -> (i32, i32) {
    %c0_i32 = arith.constant 0 : i32
    %c0_i32_0 = arith.constant 0 : i32
    %c0_i32_1 = arith.constant 0 : i32
    return %c0_i32, %c0_i32_0 : i32, i32
  }
  func.func @transform_5(%arg0: i32) -> (i32, i32) {
    %c0_i32 = arith.constant 0 : i32
    %c0_i32_0 = arith.constant 0 : i32
    %c0_i32_1 = arith.constant 0 : i32
    return %c0_i32, %c0_i32_0 : i32, i32
  }
  func.func @transform_6(%arg0: i32) -> (i32, i32) {
    %c0_i32 = arith.constant 0 : i32
    %c0_i32_0 = arith.constant 0 : i32
    %c0_i32_1 = arith.constant 0 : i32
    return %c0_i32, %c0_i32_0 : i32, i32
  }
}

</mosaic_0001>

<llo_original>
// kernel: tpu_custom_call.1
$region0: #{tpu_custom_call.1}
  #allocation0 [shape = 'u32[]', space=smem, size = 0x4, offset = 0x4, fixed_abs, tag = 'smem constant byte address 0x4 - core index']
  #allocation1 [shape = 'u32[72,128]{1,0:T(1,128)}', space=vmem, size = 0x9000, scoped, tag = 'internal scratch']
  #allocation2 [shape = 'f32[64,64]{1,0:T(8,128)}', space=vmem, size = 0x8000, scoped, tag = 'scratch operand']
  %s0 = inlined_call_operand.vmem [shape: f32[64,32], index: 0, kind: input, shape index: {}]
  %s1 = inlined_call_operand.vmem [shape: f32[32,64], index: 1, kind: input, shape index: {}]
  %s2 = inlined_call_operand.vmem [shape: f32[1,64], index: 2, kind: input, shape index: {}]
  %s3 = inlined_call_operand.vmem [shape: f32[64,64], index: 3, kind: input, shape index: {}]
  %s4 = inlined_call_operand.vmem [shape: f32[64,8], index: 4, kind: input, shape index: {}]
  %s5 = inlined_call_operand.vmem [shape: f32[1,8], index: 5, kind: input, shape index: {}]
  %s6 = inlined_call_operand.hbm [shape: f32[8,8], index: 6, kind: output, shape index: {}]
  %s7 = sld [smem:[#allocation0]]
  $region34: #{tpu_custom_call.1} parent=0
    _
  %s9 = ssub.s32 1, %s7
  %s10 = scalar_select 0, %s9, %s7
  $region1: #{tpu_custom_call.1} parent=0
    #allocation3 [shape = 'u8[4096]{0}', space=vmem, size = 0x1000, scoped, tag = 'output window, operand 0, single buffered']
    #allocation4 [shape = 's32[1]{0}', space=sflag, size = 0x4, scoped, tag = 'scoped memory for tpu_custom_call.1']
    %11 = vsyncpa [#allocation4], 0
    // Predicated region
    $region2: #{tpu_custom_call.1} parent=1 // pred_check
      _
    $region3: #{tpu_custom_call.1} parent=1 // pred_check_branch
      %13 = sbr.rel (0) target = $region5
    $region4: #{tpu_custom_call.1} parent=1 // pred_region
      _
    $region5: #{tpu_custom_call.1} parent=1 // pred_fallthru
      _
    // Predicated region
    $region6: #{tpu_custom_call.1} parent=1 // pred_check
      _
    $region7: #{tpu_custom_call.1} parent=1 // pred_check_branch
      %15 = sbr.rel (0) target = $region9
    $region8: #{tpu_custom_call.1} parent=1 // pred_region
      _
    $region9: #{tpu_custom_call.1} parent=1 // pred_fallthru
      _
    // Predicated region
    $region10: #{tpu_custom_call.1} parent=1 // pred_check
      _
    $region11: #{tpu_custom_call.1} parent=1 // pred_check_branch
      %17 = sbr.rel (0) target = $region13
    $region12: #{tpu_custom_call.1} parent=1 // pred_region
      _
    $region13: #{tpu_custom_call.1} parent=1 // pred_fallthru
      _
    // Predicated region
    $region14: #{tpu_custom_call.1} parent=1 // pred_check
      _
    $region15: #{tpu_custom_call.1} parent=1 // pred_check_branch
      %19 = sbr.rel (0) target = $region17
    $region16: #{tpu_custom_call.1} parent=1 // pred_region
      _
    $region17: #{tpu_custom_call.1} parent=1 // pred_fallthru
      _
    // Predicated region
    $region18: #{tpu_custom_call.1} parent=1 // pred_check
      _
    $region19: #{tpu_custom_call.1} parent=1 // pred_check_branch
      %21 = sbr.rel (0) target = $region21
    $region20: #{tpu_custom_call.1} parent=1 // pred_region
      _
    $region21: #{tpu_custom_call.1} parent=1 // pred_fallthru
      _
    // Predicated region
    $region22: #{tpu_custom_call.1} parent=1 // pred_check
      _
    $region23: #{tpu_custom_call.1} parent=1 // pred_check_branch
      %23 = sbr.rel (0) target = $region25
    $region24: #{tpu_custom_call.1} parent=1 // pred_region
      _
    $region25: #{tpu_custom_call.1} parent=1 // pred_fallthru
      _
    %v24 = vld [vmem:[%s0] sm:$0xff]
    %v25 = vld [vmem:[%s0 + $0x8] sm:$0xff]
    %v26 = vld [vmem:[%s0 + $0x10] sm:$0xff]
    %v27 = vld [vmem:[%s0 + $0x18] sm:$0xff]
    %v28 = vld [vmem:[%s0 + $0x20] sm:$0xff]
    %v29 = vld [vmem:[%s0 + $0x28] sm:$0xff]
    %v30 = vld [vmem:[%s0 + $0x30] sm:$0xff]
    %v31 = vld [vmem:[%s0 + $0x38] sm:$0xff]
    %v32 = vld [vmem:[%s1] sm:$0xff]
    %v33 = vld [vmem:[%s1 + $0x8] sm:$0xff]
    %v34 = vld [vmem:[%s1 + $0x10] sm:$0xff]
    %v35 = vld [vmem:[%s1 + $0x18] sm:$0xff]
    %v36 = vld [vmem:[%s2] sm:$0x1]
    %v38 = vperm.slane %v36, 0
    %vm40 = vcmask 261120
    %v42 = vsel %vm40, %v24, 0
    %v45 = vsel %vm40, %v25, 0
    %v48 = vsel %vm40, %v26, 0
    %v51 = vsel %vm40, %v27, 0
    %v54 = vsel %vm40, %v28, 0
    %v57 = vsel %vm40, %v29, 0
    %v60 = vsel %vm40, %v30, 0
    %v63 = vsel %vm40, %v31, 0
    %65 = vmatpush.msra.mxu0 0.0
    %66 = vmatpush.msra.mxu0 0.0
    %67 = vmatpush.msra.mxu0 0.0
    %68 = vmatpush.msra.mxu0 0.0
    %69 = vmatpush.msra.mxu0 0.0
    %70 = vmatpush.msra.mxu0 0.0
    %71 = vmatpush.msra.mxu0 0.0
    %72 = vmatpush.msra.mxu0 0.0
    %73 = vmatpush.msra.mxu0 0.0
    %74 = vmatpush.msra.mxu0 0.0
    %75 = vmatpush.msra.mxu0 0.0
    %76 = vmatpush.msra.mxu0 0.0
    %77 = vmatpush.msra.mxu0 %v35
    %78 = vmatpush.msra.mxu0 %v34
    %79 = vmatpush.msra.mxu0 %v33
    %80 = vmatpush.msra.mxu0 %v32
    %81 = vmatmul.f32.gmra.mxu0 %v42
    %v82 = vpop.f32.mrf.mxu0
    %v83 = vadd.f32 %v38, %v82
    %84 = vmatmul.f32.gmra.mxu0 %v45
    %v85 = vpop.f32.mrf.mxu0
    %v86 = vadd.f32 %v38, %v85
    %87 = vmatmul.f32.gmra.mxu0 %v48
    %v88 = vpop.f32.mrf.mxu0
    %v89 = vadd.f32 %v38, %v88
    %90 = vmatmul.f32.gmra.mxu0 %v51
    %v91 = vpop.f32.mrf.mxu0
    %v92 = vadd.f32 %v38, %v91
    %93 = vmatmul.f32.gmra.mxu0 %v54
    %v94 = vpop.f32.mrf.mxu0
    %v95 = vadd.f32 %v38, %v94
    %96 = vmatmul.f32.gmra.mxu0 %v57
    %v97 = vpop.f32.mrf.mxu0
    %v98 = vadd.f32 %v38, %v97
    %99 = vmatmul.f32.gmra.mxu0 %v60
    %v100 = vpop.f32.mrf.mxu0
    %v101 = vadd.f32 %v38, %v100
    %102 = vmatmul.f32.gmra.mxu0 %v63
    %v103 = vpop.f32.mrf.mxu0
    %v104 = vadd.f32 %v38, %v103
    %105 = vdwg.mxu0
    %vm106 = vcmask 523264
    %107 = vst.msk [vmem:[#allocation2] sm:$0xff] %vm106, %v83
    %108 = vst.msk [vmem:[#allocation2 + $0x8] sm:$0xff] %vm106, %v86
    %109 = vst.msk [vmem:[#allocation2 + $0x10] sm:$0xff] %vm106, %v89
    %110 = vst.msk [vmem:[#allocation2 + $0x18] sm:$0xff] %vm106, %v92
    %111 = vst.msk [vmem:[#allocation2 + $0x20] sm:$0xff] %vm106, %v95
    %112 = vst.msk [vmem:[#allocation2 + $0x28] sm:$0xff] %vm106, %v98
    %113 = vst.msk [vmem:[#allocation2 + $0x30] sm:$0xff] %vm106, %v101
    %114 = vst.msk [vmem:[#allocation2 + $0x38] sm:$0xff] %vm106, %v104
    %v115 = vld [vmem:[%s3] sm:$0xff]
    %v116 = vld [vmem:[%s3 + $0x8] sm:$0xff]
    %v117 = vld [vmem:[%s3 + $0x10] sm:$0xff]
    %v118 = vld [vmem:[%s3 + $0x18] sm:$0xff]
    %v119 = vld [vmem:[%s3 + $0x20] sm:$0xff]
    %v120 = vld [vmem:[%s3 + $0x28] sm:$0xff]
    %v121 = vld [vmem:[%s3 + $0x30] sm:$0xff]
    %v122 = vld [vmem:[%s3 + $0x38] sm:$0xff]
    %v123 = vlaneseq
    %v124 = vand.u32 %v123, 127
    %vm125 = vcmp.lt.s32.totalorder %v124, 32
    %v126 = vld [vmem:[#allocation2] sm:$0xff]
    %v127 = vtanh.pop %v126
    %v128 = vsel %vm125, %v127, 0.0
    %v129 = vld [vmem:[#allocation2 + $0x8] sm:$0xff]
    %v131 = vsel %vm106, %v128, 0
    %133 = vmatpush.msra.mxu0 0.0
    %134 = vmatpush.msra.mxu0 0.0
    %135 = vmatpush.msra.mxu0 0.0
    %136 = vmatpush.msra.mxu0 0.0
    %137 = vmatpush.msra.mxu0 0.0
    %138 = vmatpush.msra.mxu0 0.0
    %139 = vmatpush.msra.mxu0 0.0
    %140 = vmatpush.msra.mxu0 0.0
    %141 = vmatpush.msra.mxu0 %v122
    %142 = vmatpush.msra.mxu0 %v121
    %143 = vmatpush.msra.mxu0 %v120
    %144 = vmatpush.msra.mxu0 %v119
    %145 = vmatpush.msra.mxu0 %v118
    %146 = vmatpush.msra.mxu0 %v117
    %147 = vmatpush.msra.mxu0 %v116
    %148 = vmatpush.msra.mxu0 %v115
    %149 = vmatmul.f32.gmra.mxu0 %v131
    %v150 = vpop.f32.mrf.mxu0
    %v151 = vadd.f32 %v129, %v150
    %152 = vdwg.mxu0
    %v153 = vtanh.pop %v151
    %v154 = vld [vmem:[#allocation2 + $0x10] sm:$0xff]
    %v156 = vsel %vm106, %v153, 0
    %158 = vmatpush.msra.mxu0 0.0
    %159 = vmatpush.msra.mxu0 0.0
    %160 = vmatpush.msra.mxu0 0.0
    %161 = vmatpush.msra.mxu0 0.0
    %162 = vmatpush.msra.mxu0 0.0
    %163 = vmatpush.msra.mxu0 0.0
    %164 = vmatpush.msra.mxu0 0.0
    %165 = vmatpush.msra.mxu0 0.0
    %166 = vmatpush.msra.mxu0 %v122
    %167 = vmatpush.msra.mxu0 %v121
    %168 = vmatpush.msra.mxu0 %v120
    %169 = vmatpush.msra.mxu0 %v119
    %170 = vmatpush.msra.mxu0 %v118
    %171 = vmatpush.msra.mxu0 %v117
    %172 = vmatpush.msra.mxu0 %v116
    %173 = vmatpush.msra.mxu0 %v115
    %174 = vmatmul.f32.gmra.mxu0 %v156
    %v175 = vpop.f32.mrf.mxu0
    %v176 = vadd.f32 %v154, %v175
    %177 = vdwg.mxu0
    %v178 = vtanh.pop %v176
    %v179 = vld [vmem:[#allocation2 + $0x18] sm:$0xff]
    %v181 = vsel %vm106, %v178, 0
    %183 = vmatpush.msra.mxu0 0.0
    %184 = vmatpush.msra.mxu0 0.0
    %185 = vmatpush.msra.mxu0 0.0
    %186 = vmatpush.msra.mxu0 0.0
    %187 = vmatpush.msra.mxu0 0.0
    %188 = vmatpush.msra.mxu0 0.0
    %189 = vmatpush.msra.mxu0 0.0
    %190 = vmatpush.msra.mxu0 0.0
    %191 = vmatpush.msra.mxu0 %v122
    %192 = vmatpush.msra.mxu0 %v121
    %193 = vmatpush.msra.mxu0 %v120
    %194 = vmatpush.msra.mxu0 %v119
    %195 = vmatpush.msra.mxu0 %v118
    %196 = vmatpush.msra.mxu0 %v117
    %197 = vmatpush.msra.mxu0 %v116
    %198 = vmatpush.msra.mxu0 %v115
    %199 = vmatmul.f32.gmra.mxu0 %v181
    %v200 = vpop.f32.mrf.mxu0
    %v201 = vadd.f32 %v179, %v200
    %202 = vdwg.mxu0
    %v203 = vtanh.pop %v201
    %v204 = vld [vmem:[#allocation2 + $0x20] sm:$0xff]
    %v206 = vsel %vm106, %v203, 0
    %208 = vmatpush.msra.mxu0 0.0
    %209 = vmatpush.msra.mxu0 0.0
    %210 = vmatpush.msra.mxu0 0.0
    %211 = vmatpush.msra.mxu0 0.0
    %212 = vmatpush.msra.mxu0 0.0
    %213 = vmatpush.msra.mxu0 0.0
    %214 = vmatpush.msra.mxu0 0.0
    %215 = vmatpush.msra.mxu0 0.0
    %216 = vmatpush.msra.mxu0 %v122
    %217 = vmatpush.msra.mxu0 %v121
    %218 = vmatpush.msra.mxu0 %v120
    %219 = vmatpush.msra.mxu0 %v119
    %220 = vmatpush.msra.mxu0 %v118
    %221 = vmatpush.msra.mxu0 %v117
    %222 = vmatpush.msra.mxu0 %v116
    %223 = vmatpush.msra.mxu0 %v115
    %224 = vmatmul.f32.gmra.mxu0 %v206
    %v225 = vpop.f32.mrf.mxu0
    %v226 = vadd.f32 %v204, %v225
    %227 = vdwg.mxu0
    %v228 = vtanh.pop %v226
    %v229 = vld [vmem:[#allocation2 + $0x28] sm:$0xff]
    %v231 = vsel %vm106, %v228, 0
    %233 = vmatpush.msra.mxu0 0.0
    %234 = vmatpush.msra.mxu0 0.0
    %235 = vmatpush.msra.mxu0 0.0
    %236 = vmatpush.msra.mxu0 0.0
    %237 = vmatpush.msra.mxu0 0.0
    %238 = vmatpush.msra.mxu0 0.0
    %239 = vmatpush.msra.mxu0 0.0
    %240 = vmatpush.msra.mxu0 0.0
    %241 = vmatpush.msra.mxu0 %v122
    %242 = vmatpush.msra.mxu0 %v121
    %243 = vmatpush.msra.mxu0 %v120
    %244 = vmatpush.msra.mxu0 %v119
    %245 = vmatpush.msra.mxu0 %v118
    %246 = vmatpush.msra.mxu0 %v117
    %247 = vmatpush.msra.mxu0 %v116
    %248 = vmatpush.msra.mxu0 %v115
    %249 = vmatmul.f32.gmra.mxu0 %v231
    %v250 = vpop.f32.mrf.mxu0
    %v251 = vadd.f32 %v229, %v250
    %252 = vdwg.mxu0
    %v253 = vtanh.pop %v251
    %v254 = vld [vmem:[#allocation2 + $0x30] sm:$0xff]
    %v256 = vsel %vm106, %v253, 0
    %258 = vmatpush.msra.mxu0 0.0
    %259 = vmatpush.msra.mxu0 0.0
    %260 = vmatpush.msra.mxu0 0.0
    %261 = vmatpush.msra.mxu0 0.0
    %262 = vmatpush.msra.mxu0 0.0
    %263 = vmatpush.msra.mxu0 0.0
    %264 = vmatpush.msra.mxu0 0.0
    %265 = vmatpush.msra.mxu0 0.0
    %266 = vmatpush.msra.mxu0 %v122
    %267 = vmatpush.msra.mxu0 %v121
    %268 = vmatpush.msra.mxu0 %v120
    %269 = vmatpush.msra.mxu0 %v119
    %270 = vmatpush.msra.mxu0 %v118
    %271 = vmatpush.msra.mxu0 %v117
    %272 = vmatpush.msra.mxu0 %v116
    %273 = vmatpush.msra.mxu0 %v115
    %274 = vmatmul.f32.gmra.mxu0 %v256
    %v275 = vpop.f32.mrf.mxu0
    %v276 = vadd.f32 %v254, %v275
    %277 = vdwg.mxu0
    %v278 = vtanh.pop %v276
    %v279 = vld [vmem:[#allocation2 + $0x38] sm:$0xff]
    %v281 = vsel %vm106, %v278, 0
    %283 = vmatpush.msra.mxu0 0.0
    %284 = vmatpush.msra.mxu0 0.0
    %285 = vmatpush.msra.mxu0 0.0
    %286 = vmatpush.msra.mxu0 0.0
    %287 = vmatpush.msra.mxu0 0.0
    %288 = vmatpush.msra.mxu0 0.0
    %289 = vmatpush.msra.mxu0 0.0
    %290 = vmatpush.msra.mxu0 0.0
    %291 = vmatpush.msra.mxu0 %v122
    %292 = vmatpush.msra.mxu0 %v121
    %293 = vmatpush.msra.mxu0 %v120
    %294 = vmatpush.msra.mxu0 %v119
    %295 = vmatpush.msra.mxu0 %v118
    %296 = vmatpush.msra.mxu0 %v117
    %297 = vmatpush.msra.mxu0 %v116
    %298 = vmatpush.msra.mxu0 %v115
    %299 = vmatmul.f32.gmra.mxu0 %v281
    %v300 = vpop.f32.mrf.mxu0
    %v301 = vadd.f32 %v279, %v300
    %302 = vdwg.mxu0
    %v303 = vtanh.pop %v301
    %v305 = vsel %vm106, %v303, 0
    %307 = vmatpush.msra.mxu0 0.0
    %308 = vmatpush.msra.mxu0 0.0
    %309 = vmatpush.msra.mxu0 0.0
    %310 = vmatpush.msra.mxu0 0.0
    %311 = vmatpush.msra.mxu0 0.0
    %312 = vmatpush.msra.mxu0 0.0
    %313 = vmatpush.msra.mxu0 0.0
    %314 = vmatpush.msra.mxu0 0.0
    %315 = vmatpush.msra.mxu0 %v122
    %316 = vmatpush.msra.mxu0 %v121
    %317 = vmatpush.msra.mxu0 %v120
    %318 = vmatpush.msra.mxu0 %v119
    %319 = vmatpush.msra.mxu0 %v118
    %320 = vmatpush.msra.mxu0 %v117
    %321 = vmatpush.msra.mxu0 %v116
    %322 = vmatpush.msra.mxu0 %v115
    %323 = vmatmul.f32.gmra.mxu0 %v305
    %v324 = vpop.f32.mrf.mxu0
    %v325 = vadd.f32 %v279, %v324
    %326 = vdwg.mxu0
    %v327 = vtanh.pop %v325
    %vm328 = vcmp.ge.s32.totalorder %v124, 32
    %vm329 = vcmp.lt.s32.totalorder %v124, 64
    %vm330 = vmand %vm328, %vm329
    %v331 = vsel %vm330, %v327, %v303
    %v332 = vld [vmem:[%s4] sm:$0xff]
    %v333 = vld [vmem:[%s4 + $0x8] sm:$0xff]
    %v334 = vld [vmem:[%s4 + $0x10] sm:$0xff]
    %v335 = vld [vmem:[%s4 + $0x18] sm:$0xff]
    %v336 = vld [vmem:[%s4 + $0x20] sm:$0xff]
    %v337 = vld [vmem:[%s4 + $0x28] sm:$0xff]
    %v338 = vld [vmem:[%s4 + $0x30] sm:$0xff]
    %v339 = vld [vmem:[%s4 + $0x38] sm:$0xff]
    %v340 = vld [vmem:[%s5] sm:$0x1]
    %v342 = vperm.slane %v340, 0
    %v345 = vsel %vm106, %v331, 0
    %347 = vmatpush.msra.mxu0 0.0
    %348 = vmatpush.msra.mxu0 0.0
    %349 = vmatpush.msra.mxu0 0.0
    %350 = vmatpush.msra.mxu0 0.0
    %351 = vmatpush.msra.mxu0 0.0
    %352 = vmatpush.msra.mxu0 0.0
    %353 = vmatpush.msra.mxu0 0.0
    %354 = vmatpush.msra.mxu0 0.0
    %355 = vmatpush.msra.mxu0 %v339
    %356 = vmatpush.msra.mxu0 %v338
    %357 = vmatpush.msra.mxu0 %v337
    %358 = vmatpush.msra.mxu0 %v336
    %359 = vmatpush.msra.mxu0 %v335
    %360 = vmatpush.msra.mxu0 %v334
    %361 = vmatpush.msra.mxu0 %v333
    %362 = vmatpush.msra.mxu0 %v332
    %363 = vmatmul.f32.gmra.mxu0 %v345
    %v364 = vpop.f32.mrf.mxu0
    %v365 = vadd.f32 %v342, %v364
    %366 = vdwg.mxu0
    %vm367 = vcmask 64512
    %368 = vst.msk [vmem:[#allocation3] sm:$0xff] %vm367, %v365
    // Predicated region
    $region26: #{tpu_custom_call.1} parent=1 // pred_check
      _
    $region27: #{tpu_custom_call.1} parent=1 // pred_check_branch
      %370 = sbr.rel (0) target = $region29
    $region28: #{tpu_custom_call.1} parent=1 // pred_region
      %372 = vsyncadd [#allocation4], 0
      %s374 = sshll.u32 [#allocation3], 4
      %s375 = int_to_ptr.vmem [resolvable:$true] %s374
      %s376 = sshll.u32 %s6, 4
      %s377 = int_to_ptr.hbm [resolvable:$true] %s376
      %379 = dma.vmem_to_hbm [thread:$0]  %s375, 128, %s377, [#allocation4]
    $region29: #{tpu_custom_call.1} parent=1 // pred_fallthru
      _
    // Predicated region
    $region30: #{tpu_custom_call.1} parent=1 // pred_check
      _
    $region31: #{tpu_custom_call.1} parent=1 // pred_check_branch
      %381 = sbr.rel (0) target = $region33
    $region32: #{tpu_custom_call.1} parent=1 // pred_region
      %383 = dma.done [#allocation4], 128
    $region33: #{tpu_custom_call.1} parent=1 // pred_fallthru
      _
    %384 = vsyncpa [#allocation4], 1

</llo_original>
